<compile_context>
chip_gen: v7x
topology: tpu7x:2x2x1
jax: 0.10.0
libtpu: 0.0.40
codegen_flags: <defaults>
</compile_context>

<pallas_src>
import jax
import jax.numpy as jnp
import numpy as np
from jax.experimental import pallas as pl
from jax.experimental.pallas import tpu as pltpu

LANE = 128
HIDDEN = 256


def _round_up(n, m):
    return int(pl.cdiv(n, m) * m)


def policy_kernel(x_ref,
                  w1_ref, b1_ref, w2_ref, b2_ref, w3_ref, b3_ref,
                  w4_ref, b4_ref, w5_ref, b5_ref, o_ref):
    """5 x (matmul + bias + ReLU) on a (TB, features) activation tile.

    Weights are bf16; activations are cast to bf16 at the MXU input and the
    accumulation / bias / ReLU epilogue stays f32."""
    def layer(h, w_ref, b_ref):
        acc = jnp.dot(h.astype(jnp.bfloat16), w_ref[...],
                      preferred_element_type=jnp.float32)
        return jnp.maximum(acc + b_ref[...], 0.0)

    h = x_ref[...]                       # (TB, n_in_pad) f32
    h = layer(h, w1_ref, b1_ref)         # Conv1d k=3 p=1 (center tap)
    h = layer(h, w2_ref, b2_ref)         # Conv1d k=3 p=1 (center tap)
    h = layer(h, w3_ref, b3_ref)         # Conv1d k=1
    h = layer(h, w4_ref, b4_ref)         # Linear(256, 256)
    h = layer(h, w5_ref, b5_ref)         # Linear(256, n_output) + final ReLU
    o_ref[...] = h.astype(o_ref.dtype)


def policy_forward_batched(xb, packed, n_output):
    """xb: (B, n_input) f32  ->  (B, n_output) f32."""
    (w1, b1, w2, b2, w3, b3, w4, b4, w5, b5) = packed
    B, n_input = xb.shape
    n_in_pad = w1.shape[0]
    n_out_pad = w5.shape[1]

    # Batch tile: a multiple of 8 sublanes, at most 128 rows per grid step.
    tb = min(_round_up(B, 8), 128)
    b_pad = _round_up(B, tb)

    x_pad = jnp.zeros((b_pad, n_in_pad), jnp.float32).at[:B, :n_input].set(xb)

    # Weights/biases: full-array blocks, constant index_map -> loaded once and
    # kept resident in VMEM across all batch-tile grid steps.
    def weight_spec(shape):
        return pl.BlockSpec(shape, lambda i: (0, 0))

    out = pl.pallas_call(
        policy_kernel,
        out_shape=jax.ShapeDtypeStruct((b_pad, n_out_pad), jnp.float32),
        grid=(b_pad // tb,),
        in_specs=[
            pl.BlockSpec((tb, n_in_pad), lambda i: (i, 0)),      # x batch tile
            weight_spec(w1.shape), weight_spec(b1.shape),
            weight_spec(w2.shape), weight_spec(b2.shape),
            weight_spec(w3.shape), weight_spec(b3.shape),
            weight_spec(w4.shape), weight_spec(b4.shape),
            weight_spec(w5.shape), weight_spec(b5.shape),
        ],
        out_specs=pl.BlockSpec((tb, n_out_pad), lambda i: (i, 0)),
        compiler_params=pltpu.CompilerParams(
            dimension_semantics=("parallel",)),
    )(x_pad, w1, b1, w2, b2, w3, b3, w4, b4, w5, b5)
    return out[:B, :n_output]


def policy_forward(x, packed, n_output):
    """Exact module interface: x:(n_input,) -> (n_output,)."""
    return policy_forward_batched(x[None, :], packed, n_output)[0]


def make_torch_params(key, n_input, n_output, hidden=HIDDEN):
    """Deterministic synthetic parameters with the PyTorch module's shapes."""
    ks = jax.random.split(key, 10)
    s = 0.05
    w1 = s * jax.random.normal(ks[0], (hidden, n_input, 3), jnp.float32)
    b1 = s * jax.random.normal(ks[1], (hidden,), jnp.float32)
    w2 = s * jax.random.normal(ks[2], (hidden, hidden, 3), jnp.float32)
    b2 = s * jax.random.normal(ks[3], (hidden,), jnp.float32)
    w3 = s * jax.random.normal(ks[4], (hidden, hidden, 1), jnp.float32)
    b3 = s * jax.random.normal(ks[5], (hidden,), jnp.float32)
    w4 = s * jax.random.normal(ks[6], (hidden, hidden), jnp.float32)
    b4 = s * jax.random.normal(ks[7], (hidden,), jnp.float32)
    w5 = s * jax.random.normal(ks[8], (n_output, hidden), jnp.float32)
    b5 = s * jax.random.normal(ks[9], (n_output,), jnp.float32)
    return (w1, b1, w2, b2, w3, b3, w4, b4, w5, b5)


def pack_params(tp, n_input, n_output, hidden=HIDDEN):
    """Kernel layout: (in, out) bf16 weights zero-padded to lane multiples,
    (1, out) f32 biases.  Center taps of the k=3 convs are exact for the
    length-1 / zero-padded spatial dim."""
    (w1, b1, w2, b2, w3, b3, w4, b4, w5, b5) = tp
    n_in_pad = _round_up(n_input, LANE)
    n_out_pad = _round_up(n_output, LANE)

    w1k = jnp.zeros((n_in_pad, hidden), jnp.float32).at[:n_input].set(
        w1[:, :, 1].T).astype(jnp.bfloat16)
    w2k = w2[:, :, 1].T.astype(jnp.bfloat16)
    w3k = w3[:, :, 0].T.astype(jnp.bfloat16)
    w4k = w4.T.astype(jnp.bfloat16)
    w5k = jnp.zeros((hidden, n_out_pad), jnp.float32).at[:, :n_output].set(
        w5.T).astype(jnp.bfloat16)
    b5k = jnp.zeros((1, n_out_pad), jnp.float32).at[:, :n_output].set(
        b5.reshape(1, -1))
    return (w1k, b1.reshape(1, -1), w2k, b2.reshape(1, -1),
            w3k, b3.reshape(1, -1), w4k, b4.reshape(1, -1), w5k, b5k)


def policy_forward_ref_f32(xb, tp):
    """Pure-JAX f32 reference with the module's exact math (rows = batch)."""
    (w1, b1, w2, b2, w3, b3, w4, b4, w5, b5) = tp
    h = xb
    h = jnp.maximum(h @ w1[:, :, 1].T + b1, 0.0)
    h = jnp.maximum(h @ w2[:, :, 1].T + b2, 0.0)
    h = jnp.maximum(h @ w3[:, :, 0].T + b3, 0.0)
    h = jnp.maximum(h @ w4.T + b4, 0.0)
    h = jnp.maximum(h @ w5.T + b5, 0.0)
    return h


def policy_forward_ref_packed(xb, packed, n_output):
    """Pure-JAX reference reproducing the kernel's bf16-weight math."""
    (w1, b1, w2, b2, w3, b3, w4, b4, w5, b5) = packed
    B, n_input = xb.shape
    n_in_pad = w1.shape[0]
    h = jnp.zeros((B, n_in_pad), jnp.float32).at[:, :n_input].set(xb)
    for w, b in ((w1, b1), (w2, b2), (w3, b3), (w4, b4), (w5, b5)):
        acc = jnp.dot(h.astype(jnp.bfloat16), w,
                      preferred_element_type=jnp.float32)
        h = jnp.maximum(acc + b, 0.0)
    return h[:, :n_output]


if __name__ == "__main__":
    n_input, n_output = 32, 8          # small shapes consistent with the module
    batch = 16                         # exercises the batched / gridded path
    key = jax.random.PRNGKey(0)
    k_param, k_x = jax.random.split(key)

    torch_params = make_torch_params(k_param, n_input, n_output)
    packed = pack_params(torch_params, n_input, n_output)
    xb = jax.random.normal(k_x, (batch, n_input), jnp.float32)

    # Batched kernel run.
    out_b = jax.block_until_ready(policy_forward_batched(xb, packed, n_output))
    assert out_b.shape == (batch, n_output)

    # Exact-math reference (same bf16 weights, f32 accumulation).
    ref_b = np.asarray(policy_forward_ref_packed(xb, packed, n_output))
    np.testing.assert_allclose(np.asarray(out_b), ref_b, rtol=1e-3, atol=1e-3)

    # Module-semantics f32 reference (loose tolerance for bf16 weight storage).
    ref_f32 = np.asarray(policy_forward_ref_f32(xb, torch_params))
    np.testing.assert_allclose(np.asarray(out_b), ref_f32, rtol=5e-2, atol=5e-2)

    # Single-vector path == the PyTorch module's forward(x) interface.
    out1 = jax.block_until_ready(policy_forward(xb[0], packed, n_output))
    assert out1.shape == (n_output,)
    np.testing.assert_allclose(np.asarray(out1), np.asarray(out_b[0]),
                               rtol=1e-3, atol=1e-3)

    print("KERNEL_OK")
</pallas_src>

<mosaic_0001>
module attributes {stable_mosaic.version = 11 : i64} {
  func.func @policy_kernel(%arg0: i32, %arg1: memref<16x128xf32, #tpu.memory_space<vmem>>, %arg2: memref<128x256xbf16, #tpu.memory_space<vmem>>, %arg3: memref<1x256xf32, #tpu.memory_space<vmem>>, %arg4: memref<256x256xbf16, #tpu.memory_space<vmem>>, %arg5: memref<1x256xf32, #tpu.memory_space<vmem>>, %arg6: memref<256x256xbf16, #tpu.memory_space<vmem>>, %arg7: memref<1x256xf32, #tpu.memory_space<vmem>>, %arg8: memref<256x256xbf16, #tpu.memory_space<vmem>>, %arg9: memref<1x256xf32, #tpu.memory_space<vmem>>, %arg10: memref<256x128xbf16, #tpu.memory_space<vmem>>, %arg11: memref<1x128xf32, #tpu.memory_space<vmem>>, %arg12: memref<16x128xf32, #tpu.memory_space<vmem>>) attributes {dimension_semantics = [#tpu.dimension_semantics<parallel>], iteration_bounds = array<i64: 1>, scalar_prefetch = 0 : i64, scratch_operands = 0 : i64, tpu.core_type = #tpu.core_type<tc>, window_params = [{transform_indices = @transform_0, window_bounds = array<i64: 16, 128>}, {pipeline_mode = #tpu.pipeline_mode<synchronous>, transform_indices = @transform_1, window_bounds = array<i64: 128, 256>}, {pipeline_mode = #tpu.pipeline_mode<synchronous>, transform_indices = @transform_2, window_bounds = array<i64: 1, 256>}, {pipeline_mode = #tpu.pipeline_mode<synchronous>, transform_indices = @transform_3, window_bounds = array<i64: 256, 256>}, {pipeline_mode = #tpu.pipeline_mode<synchronous>, transform_indices = @transform_4, window_bounds = array<i64: 1, 256>}, {pipeline_mode = #tpu.pipeline_mode<synchronous>, transform_indices = @transform_5, window_bounds = array<i64: 256, 256>}, {pipeline_mode = #tpu.pipeline_mode<synchronous>, transform_indices = @transform_6, window_bounds = array<i64: 1, 256>}, {pipeline_mode = #tpu.pipeline_mode<synchronous>, transform_indices = @transform_7, window_bounds = array<i64: 256, 256>}, {pipeline_mode = #tpu.pipeline_mode<synchronous>, transform_indices = @transform_8, window_bounds = array<i64: 1, 256>}, {pipeline_mode = #tpu.pipeline_mode<synchronous>, transform_indices = @transform_9, window_bounds = array<i64: 256, 128>}, {pipeline_mode = #tpu.pipeline_mode<synchronous>, transform_indices = @transform_10, window_bounds = array<i64: 1, 128>}, {transform_indices = @transform_11, window_bounds = array<i64: 16, 128>}]} {
    %c0 = arith.constant 0 : index
    %c0_0 = arith.constant 0 : index
    %0 = vector.load %arg1[%c0, %c0_0] : memref<16x128xf32, #tpu.memory_space<vmem>>, vector<16x128xf32>
    %1 = arith.truncf %0 : vector<16x128xf32> to vector<16x128xbf16>
    %c0_1 = arith.constant 0 : index
    %c0_2 = arith.constant 0 : index
    %2 = vector.load %arg2[%c0_1, %c0_2] : memref<128x256xbf16, #tpu.memory_space<vmem>>, vector<128x256xbf16>
    %cst = arith.constant dense<0.000000e+00> : vector<16x256xf32>
    %3 = tpu.matmul %1, %2, %cst {dimension_numbers = #tpu.dot_dimension_numbers<[1], [0], [0], [1], [0, 0, 1, 1], [], []>} : vector<16x128xbf16>, vector<128x256xbf16>, vector<16x256xf32> -> vector<16x256xf32>
    %c0_3 = arith.constant 0 : index
    %c0_4 = arith.constant 0 : index
    %4 = vector.load %arg3[%c0_3, %c0_4] : memref<1x256xf32, #tpu.memory_space<vmem>>, vector<1x256xf32>
    %5 = vector.broadcast %4 : vector<1x256xf32> to vector<16x256xf32>
    %6 = arith.addf %3, %5 : vector<16x256xf32>
    %cst_5 = arith.constant 0.000000e+00 : f32
    %7 = vector.broadcast %cst_5 : f32 to vector<16x256xf32>
    %8 = arith.maximumf %6, %7 : vector<16x256xf32>
    %9 = arith.truncf %8 : vector<16x256xf32> to vector<16x256xbf16>
    %c0_6 = arith.constant 0 : index
    %c0_7 = arith.constant 0 : index
    %10 = vector.load %arg4[%c0_6, %c0_7] : memref<256x256xbf16, #tpu.memory_space<vmem>>, vector<256x256xbf16>
    %cst_8 = arith.constant dense<0.000000e+00> : vector<16x256xf32>
    %11 = tpu.matmul %9, %10, %cst_8 {dimension_numbers = #tpu.dot_dimension_numbers<[1], [0], [0], [1], [0, 0, 1, 1], [], []>} : vector<16x256xbf16>, vector<256x256xbf16>, vector<16x256xf32> -> vector<16x256xf32>
    %c0_9 = arith.constant 0 : index
    %c0_10 = arith.constant 0 : index
    %12 = vector.load %arg5[%c0_9, %c0_10] : memref<1x256xf32, #tpu.memory_space<vmem>>, vector<1x256xf32>
    %13 = vector.broadcast %12 : vector<1x256xf32> to vector<16x256xf32>
    %14 = arith.addf %11, %13 : vector<16x256xf32>
    %cst_11 = arith.constant 0.000000e+00 : f32
    %15 = vector.broadcast %cst_11 : f32 to vector<16x256xf32>
    %16 = arith.maximumf %14, %15 : vector<16x256xf32>
    %17 = arith.truncf %16 : vector<16x256xf32> to vector<16x256xbf16>
    %c0_12 = arith.constant 0 : index
    %c0_13 = arith.constant 0 : index
    %18 = vector.load %arg6[%c0_12, %c0_13] : memref<256x256xbf16, #tpu.memory_space<vmem>>, vector<256x256xbf16>
    %cst_14 = arith.constant dense<0.000000e+00> : vector<16x256xf32>
    %19 = tpu.matmul %17, %18, %cst_14 {dimension_numbers = #tpu.dot_dimension_numbers<[1], [0], [0], [1], [0, 0, 1, 1], [], []>} : vector<16x256xbf16>, vector<256x256xbf16>, vector<16x256xf32> -> vector<16x256xf32>
    %c0_15 = arith.constant 0 : index
    %c0_16 = arith.constant 0 : index
    %20 = vector.load %arg7[%c0_15, %c0_16] : memref<1x256xf32, #tpu.memory_space<vmem>>, vector<1x256xf32>
    %21 = vector.broadcast %20 : vector<1x256xf32> to vector<16x256xf32>
    %22 = arith.addf %19, %21 : vector<16x256xf32>
    %cst_17 = arith.constant 0.000000e+00 : f32
    %23 = vector.broadcast %cst_17 : f32 to vector<16x256xf32>
    %24 = arith.maximumf %22, %23 : vector<16x256xf32>
    %25 = arith.truncf %24 : vector<16x256xf32> to vector<16x256xbf16>
    %c0_18 = arith.constant 0 : index
    %c0_19 = arith.constant 0 : index
    %26 = vector.load %arg8[%c0_18, %c0_19] : memref<256x256xbf16, #tpu.memory_space<vmem>>, vector<256x256xbf16>
    %cst_20 = arith.constant dense<0.000000e+00> : vector<16x256xf32>
    %27 = tpu.matmul %25, %26, %cst_20 {dimension_numbers = #tpu.dot_dimension_numbers<[1], [0], [0], [1], [0, 0, 1, 1], [], []>} : vector<16x256xbf16>, vector<256x256xbf16>, vector<16x256xf32> -> vector<16x256xf32>
    %c0_21 = arith.constant 0 : index
    %c0_22 = arith.constant 0 : index
    %28 = vector.load %arg9[%c0_21, %c0_22] : memref<1x256xf32, #tpu.memory_space<vmem>>, vector<1x256xf32>
    %29 = vector.broadcast %28 : vector<1x256xf32> to vector<16x256xf32>
    %30 = arith.addf %27, %29 : vector<16x256xf32>
    %cst_23 = arith.constant 0.000000e+00 : f32
    %31 = vector.broadcast %cst_23 : f32 to vector<16x256xf32>
    %32 = arith.maximumf %30, %31 : vector<16x256xf32>
    %33 = arith.truncf %32 : vector<16x256xf32> to vector<16x256xbf16>
    %c0_24 = arith.constant 0 : index
    %c0_25 = arith.constant 0 : index
    %34 = vector.load %arg10[%c0_24, %c0_25] : memref<256x128xbf16, #tpu.memory_space<vmem>>, vector<256x128xbf16>
    %cst_26 = arith.constant dense<0.000000e+00> : vector<16x128xf32>
    %35 = tpu.matmul %33, %34, %cst_26 {dimension_numbers = #tpu.dot_dimension_numbers<[1], [0], [0], [1], [0, 0, 1, 1], [], []>} : vector<16x256xbf16>, vector<256x128xbf16>, vector<16x128xf32> -> vector<16x128xf32>
    %c0_27 = arith.constant 0 : index
    %c0_28 = arith.constant 0 : index
    %36 = vector.load %arg11[%c0_27, %c0_28] : memref<1x128xf32, #tpu.memory_space<vmem>>, vector<1x128xf32>
    %37 = vector.broadcast %36 : vector<1x128xf32> to vector<16x128xf32>
    %38 = arith.addf %35, %37 : vector<16x128xf32>
    %cst_29 = arith.constant 0.000000e+00 : f32
    %39 = vector.broadcast %cst_29 : f32 to vector<16x128xf32>
    %40 = arith.maximumf %38, %39 : vector<16x128xf32>
    %c0_30 = arith.constant 0 : index
    %c0_31 = arith.constant 0 : index
    %41 = vector.load %arg12[%c0_30, %c0_31] : memref<16x128xf32, #tpu.memory_space<vmem>>, vector<16x128xf32>
    tpu.vector_store %arg12[%c0_30, %c0_31], %40 {strides = array<i32>} : memref<16x128xf32, #tpu.memory_space<vmem>>, vector<16x128xf32>,
    return
  }
  func.func @transform_0(%arg0: i32) -> (i32, i32) {
    %c0_i32 = arith.constant 0 : i32
    %c0_i32_0 = arith.constant 0 : i32
    return %arg0, %c0_i32 : i32, i32
  }
  func.func @transform_1(%arg0: i32) -> (i32, i32) {
    %c0_i32 = arith.constant 0 : i32
    %c0_i32_0 = arith.constant 0 : i32
    %c0_i32_1 = arith.constant 0 : i32
    return %c0_i32, %c0_i32_0 : i32, i32
  }
  func.func @transform_2(%arg0: i32) -> (i32, i32) {
    %c0_i32 = arith.constant 0 : i32
    %c0_i32_0 = arith.constant 0 : i32
    %c0_i32_1 = arith.constant 0 : i32
    return %c0_i32, %c0_i32_0 : i32, i32
  }
  func.func @transform_3(%arg0: i32) -> (i32, i32) {
    %c0_i32 = arith.constant 0 : i32
    %c0_i32_0 = arith.constant 0 : i32
    %c0_i32_1 = arith.constant 0 : i32
    return %c0_i32, %c0_i32_0 : i32, i32
  }
  func.func @transform_4(%arg0: i32) -> (i32, i32) {
    %c0_i32 = arith.constant 0 : i32
    %c0_i32_0 = arith.constant 0 : i32
    %c0_i32_1 = arith.constant 0 : i32
    return %c0_i32, %c0_i32_0 : i32, i32
  }
  func.func @transform_5(%arg0: i32) -> (i32, i32) {
    %c0_i32 = arith.constant 0 : i32
    %c0_i32_0 = arith.constant 0 : i32
    %c0_i32_1 = arith.constant 0 : i32
    return %c0_i32, %c0_i32_0 : i32, i32
  }
  func.func @transform_6(%arg0: i32) -> (i32, i32) {
    %c0_i32 = arith.constant 0 : i32
    %c0_i32_0 = arith.constant 0 : i32
    %c0_i32_1 = arith.constant 0 : i32
    return %c0_i32, %c0_i32_0 : i32, i32
  }
  func.func @transform_7(%arg0: i32) -> (i32, i32) {
    %c0_i32 = arith.constant 0 : i32
    %c0_i32_0 = arith.constant 0 : i32
    %c0_i32_1 = arith.constant 0 : i32
    return %c0_i32, %c0_i32_0 : i32, i32
  }
  func.func @transform_8(%arg0: i32) -> (i32, i32) {
    %c0_i32 = arith.constant 0 : i32
    %c0_i32_0 = arith.constant 0 : i32
    %c0_i32_1 = arith.constant 0 : i32
    return %c0_i32, %c0_i32_0 : i32, i32
  }
  func.func @transform_9(%arg0: i32) -> (i32, i32) {
    %c0_i32 = arith.constant 0 : i32
    %c0_i32_0 = arith.constant 0 : i32
    %c0_i32_1 = arith.constant 0 : i32
    return %c0_i32, %c0_i32_0 : i32, i32
  }
  func.func @transform_10(%arg0: i32) -> (i32, i32) {
    %c0_i32 = arith.constant 0 : i32
    %c0_i32_0 = arith.constant 0 : i32
    %c0_i32_1 = arith.constant 0 : i32
    return %c0_i32, %c0_i32_0 : i32, i32
  }
  func.func @transform_11(%arg0: i32) -> (i32, i32) {
    %c0_i32 = arith.constant 0 : i32
    %c0_i32_0 = arith.constant 0 : i32
    return %arg0, %c0_i32 : i32, i32
  }
}

</mosaic_0001>

<llo_original>
// kernel: tpu_custom_call.1
$region0: #{tpu_custom_call.1}
  #allocation0 [shape = 'u32[]', space=smem, size = 0x4, offset = 0x4, fixed_abs, tag = 'smem constant byte address 0x4 - core index']
  #allocation1 [shape = 'u32[144,128]{1,0:T(1,128)}', space=vmem, size = 0x12000, scoped, tag = 'internal scratch']
  %s0 = inlined_call_operand.hbm [shape: f32[16,128], index: 0, kind: input, shape index: {}]
  %s1 = inlined_call_operand.hbm [shape: bf16[128,256], index: 1, kind: input, shape index: {}]
  %s2 = inlined_call_operand.vmem [shape: f32[1,256], index: 2, kind: input, shape index: {}]
  %s3 = inlined_call_operand.hbm [shape: bf16[256,256], index: 3, kind: input, shape index: {}]
  %s4 = inlined_call_operand.vmem [shape: f32[1,256], index: 4, kind: input, shape index: {}]
  %s5 = inlined_call_operand.hbm [shape: bf16[256,256], index: 5, kind: input, shape index: {}]
  %s6 = inlined_call_operand.vmem [shape: f32[1,256], index: 6, kind: input, shape index: {}]
  %s7 = inlined_call_operand.hbm [shape: bf16[256,256], index: 7, kind: input, shape index: {}]
  %s8 = inlined_call_operand.vmem [shape: f32[1,256], index: 8, kind: input, shape index: {}]
  %s9 = inlined_call_operand.hbm [shape: bf16[256,128], index: 9, kind: input, shape index: {}]
  %s10 = inlined_call_operand.vmem [shape: f32[1,128], index: 10, kind: input, shape index: {}]
  %s11 = inlined_call_operand.hbm [shape: f32[16,128], index: 11, kind: output, shape index: {}]
  %s12 = sld [smem:[#allocation0]]
  $region78: #{tpu_custom_call.1} parent=0
    _
  %s14 = ssub.s32 1, %s12
  %s15 = scalar_select 0, %s14, %s12
  $region1: #{tpu_custom_call.1} parent=0
    #allocation2 [shape = 'u8[8192]{0}', space=vmem, size = 0x2000, scoped, tag = 'input window, operand 0, single buffered']
    #allocation3 [shape = 's32[1]{0}', space=sflag, size = 0x4, scoped, tag = 'scoped memory for tpu_custom_call.1']
    #allocation4 [shape = 's32[1]{0}', space=sflag, size = 0x4, scoped, tag = 'scoped memory for tpu_custom_call.1']
    #allocation5 [shape = 'u8[65536]{0}', space=vmem, size = 0x10000, scoped, tag = 'input window, operand 1, single buffered']
    #allocation6 [shape = 's32[1]{0}', space=sflag, size = 0x4, scoped, tag = 'scoped memory for tpu_custom_call.1']
    #allocation7 [shape = 'u8[131072]{0}', space=vmem, size = 0x20000, scoped, tag = 'input window, operand 3, single buffered']
    #allocation8 [shape = 'u8[131072]{0}', space=vmem, size = 0x20000, scoped, tag = 'input window, operand 5, single buffered']
    #allocation9 [shape = 's32[1]{0}', space=sflag, size = 0x4, scoped, tag = 'scoped memory for tpu_custom_call.1']
    #allocation10 [shape = 'u8[131072]{0}', space=vmem, size = 0x20000, scoped, tag = 'input window, operand 7, single buffered']
    #allocation11 [shape = 'u8[65536]{0}', space=vmem, size = 0x10000, scoped, tag = 'input window, operand 9, single buffered']
    #allocation12 [shape = 's32[1]{0}', space=sflag, size = 0x4, scoped, tag = 'scoped memory for tpu_custom_call.1']
    #allocation13 [shape = 'u8[8192]{0}', space=vmem, size = 0x2000, scoped, tag = 'output window, operand 0, single buffered']
    %16 = vsyncpa [#allocation3], 0
    %17 = vsyncpa [#allocation6], 0
    %18 = vsyncpa [#allocation9], 0
    %19 = vsyncpa [#allocation12], 0
    %20 = vsyncpa [#allocation4], 0
    // Predicated region
    $region2: #{tpu_custom_call.1} parent=1 // pred_check
      _
    $region3: #{tpu_custom_call.1} parent=1 // pred_check_branch
      %22 = sbr.rel (0) target = $region5
    $region4: #{tpu_custom_call.1} parent=1 // pred_region
      %s24 = ssub.s32 256, 256
      %25 = vsyncadd [#allocation3], %s24
      %s26 = sshll.u32 [#allocation2], 4
      %s27 = int_to_ptr.vmem [resolvable:$true] %s26
      %32 = dma.hbm_to_vmem [thread:$0]  %s0, 256, %s27, [#allocation3], 128, 128, 8
    $region5: #{tpu_custom_call.1} parent=1 // pred_fallthru
      _
    // Predicated region
    $region6: #{tpu_custom_call.1} parent=1 // pred_check
      _
    $region7: #{tpu_custom_call.1} parent=1 // pred_check_branch
      %34 = sbr.rel (0) target = $region9
    $region8: #{tpu_custom_call.1} parent=1 // pred_region
      %s36 = ssub.s32 2048, 2048
      %37 = vsyncadd [#allocation6], %s36
      %s38 = sshll.u32 [#allocation5], 4
      %s39 = int_to_ptr.vmem [resolvable:$true] %s38
      %44 = dma.hbm_to_vmem [thread:$0]  %s1, 2048, %s39, [#allocation6], 128, 128, 8
    $region9: #{tpu_custom_call.1} parent=1 // pred_fallthru
      _
    // Predicated region
    $region10: #{tpu_custom_call.1} parent=1 // pred_check
      _
    $region11: #{tpu_custom_call.1} parent=1 // pred_check_branch
      %46 = sbr.rel (0) target = $region13
    $region12: #{tpu_custom_call.1} parent=1 // pred_region
      _
    $region13: #{tpu_custom_call.1} parent=1 // pred_fallthru
      _
    // Predicated region
    $region14: #{tpu_custom_call.1} parent=1 // pred_check
      _
    $region15: #{tpu_custom_call.1} parent=1 // pred_check_branch
      %48 = sbr.rel (0) target = $region17
    $region16: #{tpu_custom_call.1} parent=1 // pred_region
      %s50 = ssub.s32 4096, 4096
      %51 = vsyncadd [#allocation6], %s50
      %s52 = sshll.u32 [#allocation7], 4
      %s53 = int_to_ptr.vmem [resolvable:$true] %s52
      %58 = dma.hbm_to_vmem [thread:$0]  %s3, 4096, %s53, [#allocation6], 128, 128, 8
    $region17: #{tpu_custom_call.1} parent=1 // pred_fallthru
      _
    // Predicated region
    $region18: #{tpu_custom_call.1} parent=1 // pred_check
      _
    $region19: #{tpu_custom_call.1} parent=1 // pred_check_branch
      %60 = sbr.rel (0) target = $region21
    $region20: #{tpu_custom_call.1} parent=1 // pred_region
      _
    $region21: #{tpu_custom_call.1} parent=1 // pred_fallthru
      _
    // Predicated region
    $region22: #{tpu_custom_call.1} parent=1 // pred_check
      _
    $region23: #{tpu_custom_call.1} parent=1 // pred_check_branch
      %62 = sbr.rel (0) target = $region25
    $region24: #{tpu_custom_call.1} parent=1 // pred_region
      %s64 = ssub.s32 4096, 4096
      %65 = vsyncadd [#allocation9], %s64
      %s66 = sshll.u32 [#allocation8], 4
      %s67 = int_to_ptr.vmem [resolvable:$true] %s66
      %72 = dma.hbm_to_vmem [thread:$0]  %s5, 4096, %s67, [#allocation9], 128, 128, 8
    $region25: #{tpu_custom_call.1} parent=1 // pred_fallthru
      _
    // Predicated region
    $region26: #{tpu_custom_call.1} parent=1 // pred_check
      _
    $region27: #{tpu_custom_call.1} parent=1 // pred_check_branch
      %74 = sbr.rel (0) target = $region29
    $region28: #{tpu_custom_call.1} parent=1 // pred_region
      _
    $region29: #{tpu_custom_call.1} parent=1 // pred_fallthru
      _
    // Predicated region
    $region30: #{tpu_custom_call.1} parent=1 // pred_check
      _
    $region31: #{tpu_custom_call.1} parent=1 // pred_check_branch
      %76 = sbr.rel (0) target = $region33
    $region32: #{tpu_custom_call.1} parent=1 // pred_region
      %s78 = ssub.s32 4096, 4096
      %79 = vsyncadd [#allocation9], %s78
      %s80 = sshll.u32 [#allocation10], 4
      %s81 = int_to_ptr.vmem [resolvable:$true] %s80
      %86 = dma.hbm_to_vmem [thread:$0]  %s7, 4096, %s81, [#allocation9], 128, 128, 8
    $region33: #{tpu_custom_call.1} parent=1 // pred_fallthru
      _
    // Predicated region
    $region34: #{tpu_custom_call.1} parent=1 // pred_check
      _
    $region35: #{tpu_custom_call.1} parent=1 // pred_check_branch
      %88 = sbr.rel (0) target = $region37
    $region36: #{tpu_custom_call.1} parent=1 // pred_region
      _
    $region37: #{tpu_custom_call.1} parent=1 // pred_fallthru
      _
    // Predicated region
    $region38: #{tpu_custom_call.1} parent=1 // pred_check
      _
    $region39: #{tpu_custom_call.1} parent=1 // pred_check_branch
      %90 = sbr.rel (0) target = $region41
    $region40: #{tpu_custom_call.1} parent=1 // pred_region
      %s92 = ssub.s32 2048, 2048
      %93 = vsyncadd [#allocation12], %s92
      %s94 = sshll.u32 [#allocation11], 4
      %s95 = int_to_ptr.vmem [resolvable:$true] %s94
      %100 = dma.hbm_to_vmem [thread:$0]  %s9, 2048, %s95, [#allocation12], 64, 64, 4
    $region41: #{tpu_custom_call.1} parent=1 // pred_fallthru
      _
    // Predicated region
    $region42: #{tpu_custom_call.1} parent=1 // pred_check
      _
    $region43: #{tpu_custom_call.1} parent=1 // pred_check_branch
      %102 = sbr.rel (0) target = $region45
    $region44: #{tpu_custom_call.1} parent=1 // pred_region
      _
    $region45: #{tpu_custom_call.1} parent=1 // pred_fallthru
      _
    // Predicated region
    $region46: #{tpu_custom_call.1} parent=1 // pred_check
      _
    $region47: #{tpu_custom_call.1} parent=1 // pred_check_branch
      %104 = sbr.rel (0) target = $region49
    $region48: #{tpu_custom_call.1} parent=1 // pred_region
      %105 = dma.done [#allocation3], 256
    $region49: #{tpu_custom_call.1} parent=1 // pred_fallthru
      _
    // Predicated region
    $region50: #{tpu_custom_call.1} parent=1 // pred_check
      _
    $region51: #{tpu_custom_call.1} parent=1 // pred_check_branch
      %107 = sbr.rel (0) target = $region53
    $region52: #{tpu_custom_call.1} parent=1 // pred_region
      %108 = dma.done [#allocation6], 2048
    $region53: #{tpu_custom_call.1} parent=1 // pred_fallthru
      _
    // Predicated region
    $region54: #{tpu_custom_call.1} parent=1 // pred_check
      _
    $region55: #{tpu_custom_call.1} parent=1 // pred_check_branch
      %110 = sbr.rel (0) target = $region57
    $region56: #{tpu_custom_call.1} parent=1 // pred_region
      %111 = dma.done [#allocation6], 4096
    $region57: #{tpu_custom_call.1} parent=1 // pred_fallthru
      _
    // Predicated region
    $region58: #{tpu_custom_call.1} parent=1 // pred_check
      _
    $region59: #{tpu_custom_call.1} parent=1 // pred_check_branch
      %113 = sbr.rel (0) target = $region61
    $region60: #{tpu_custom_call.1} parent=1 // pred_region
      %114 = dma.done [#allocation9], 4096
    $region61: #{tpu_custom_call.1} parent=1 // pred_fallthru
      _
    // Predicated region
    $region62: #{tpu_custom_call.1} parent=1 // pred_check
      _
    $region63: #{tpu_custom_call.1} parent=1 // pred_check_branch
      %116 = sbr.rel (0) target = $region65
    $region64: #{tpu_custom_call.1} parent=1 // pred_region
      %117 = dma.done [#allocation9], 4096
    $region65: #{tpu_custom_call.1} parent=1 // pred_fallthru
      _
    // Predicated region
    $region66: #{tpu_custom_call.1} parent=1 // pred_check
      _
    $region67: #{tpu_custom_call.1} parent=1 // pred_check_branch
      %119 = sbr.rel (0) target = $region69
    $region68: #{tpu_custom_call.1} parent=1 // pred_region
      %120 = dma.done [#allocation12], 2048
    $region69: #{tpu_custom_call.1} parent=1 // pred_fallthru
      _
    %v122 = vld [vmem:[#allocation2] sm:$0xff]
    %v123 = vld [vmem:[#allocation2 + $0x8] sm:$0xff]
    %v124 = vpack.c.bf16 %v123, %v122
    %v125 = vld [vmem:[#allocation5] sm:$0xff]
    %v126 = vld [vmem:[#allocation5 + $0x8] sm:$0xff]
    %v127 = vld [vmem:[#allocation5 + $0x10] sm:$0xff]
    %v128 = vld [vmem:[#allocation5 + $0x18] sm:$0xff]
    %v129 = vld [vmem:[#allocation5 + $0x20] sm:$0xff]
    %v130 = vld [vmem:[#allocation5 + $0x28] sm:$0xff]
    %v131 = vld [vmem:[#allocation5 + $0x30] sm:$0xff]
    %v132 = vld [vmem:[#allocation5 + $0x38] sm:$0xff]
    %v133 = vld [vmem:[#allocation5 + $0x40] sm:$0xff]
    %v134 = vld [vmem:[#allocation5 + $0x48] sm:$0xff]
    %v135 = vld [vmem:[#allocation5 + $0x50] sm:$0xff]
    %v136 = vld [vmem:[#allocation5 + $0x58] sm:$0xff]
    %v137 = vld [vmem:[#allocation5 + $0x60] sm:$0xff]
    %v138 = vld [vmem:[#allocation5 + $0x68] sm:$0xff]
    %v139 = vld [vmem:[#allocation5 + $0x70] sm:$0xff]
    %v140 = vld [vmem:[#allocation5 + $0x78] sm:$0xff]
    %v141 = vld [vmem:[%s2] sm:$0x3]
    %v143 = vlaneseq
    %v144 = vshrl.u32 %v143, 7
    %v145 = vsub.s32 0, %v144
    %v146 = vrot.slane %v141, %v145
    %v147 = vlaneseq
    %v148 = vshrl.u32 %v147, 7
    %v149 = vsub.s32 1, %v148
    %v150 = vrot.slane %v141, %v149
    %v169 = vunpack.c.l.b16 %v125
    %v170 = vunpack.c.h.b16 %v125
    %v171 = vunpack.c.l.b16 %v126
    %v172 = vunpack.c.h.b16 %v126
    %v173 = vunpack.c.l.b16 %v127
    %v174 = vunpack.c.h.b16 %v127
    %v175 = vunpack.c.l.b16 %v128
    %v176 = vunpack.c.h.b16 %v128
    %v177 = vunpack.c.l.b16 %v129
    %v178 = vunpack.c.h.b16 %v129
    %v179 = vunpack.c.l.b16 %v130
    %v180 = vunpack.c.h.b16 %v130
    %v181 = vunpack.c.l.b16 %v131
    %v182 = vunpack.c.h.b16 %v131
    %v183 = vunpack.c.l.b16 %v132
    %v184 = vunpack.c.h.b16 %v132
    %v185 = vunpack.c.l.b16 %v133
    %v186 = vunpack.c.h.b16 %v133
    %v187 = vunpack.c.l.b16 %v134
    %v188 = vunpack.c.h.b16 %v134
    %v189 = vunpack.c.l.b16 %v135
    %v190 = vunpack.c.h.b16 %v135
    %v191 = vunpack.c.l.b16 %v136
    %v192 = vunpack.c.h.b16 %v136
    %v193 = vunpack.c.l.b16 %v137
    %v194 = vunpack.c.h.b16 %v137
    %v195 = vunpack.c.l.b16 %v138
    %v196 = vunpack.c.h.b16 %v138
    %v197 = vunpack.c.l.b16 %v139
    %v198 = vunpack.c.h.b16 %v139
    %v199 = vunpack.c.l.b16 %v140
    %v200 = vunpack.c.h.b16 %v140
    %v201 = vpack.c.b16 %v171, %v169
    %v202 = vpack.c.b16 %v172, %v170
    %v203 = vpack.c.b16 %v175, %v173
    %v204 = vpack.c.b16 %v176, %v174
    %v205 = vpack.c.b16 %v179, %v177
    %v206 = vpack.c.b16 %v180, %v178
    %v207 = vpack.c.b16 %v183, %v181
    %v208 = vpack.c.b16 %v184, %v182
    %v209 = vpack.c.b16 %v187, %v185
    %v210 = vpack.c.b16 %v188, %v186
    %v211 = vpack.c.b16 %v191, %v189
    %v212 = vpack.c.b16 %v192, %v190
    %v213 = vpack.c.b16 %v195, %v193
    %v214 = vpack.c.b16 %v196, %v194
    %v215 = vpack.c.b16 %v199, %v197
    %v216 = vpack.c.b16 %v200, %v198
    %233 = vmatprep.subr.bf16.mxu0 %v202
    %234 = vmatpush1.bf16.msra.mxu0 %v201
    %235 = vmatprep.subr.bf16.mxu0 %v204
    %236 = vmatpush1.bf16.msra.mxu0 %v203
    %237 = vmatprep.subr.bf16.mxu0 %v206
    %238 = vmatpush1.bf16.msra.mxu0 %v205
    %239 = vmatprep.subr.bf16.mxu0 %v208
    %240 = vmatpush1.bf16.msra.mxu0 %v207
    %241 = vmatprep.subr.bf16.mxu0 %v210
    %242 = vmatpush1.bf16.msra.mxu0 %v209
    %243 = vmatprep.subr.bf16.mxu0 %v212
    %244 = vmatpush1.bf16.msra.mxu0 %v211
    %245 = vmatprep.subr.bf16.mxu0 %v214
    %246 = vmatpush1.bf16.msra.mxu0 %v213
    %247 = vmatprep.subr.bf16.mxu0 %v216
    %248 = vmatpush1.bf16.msra.mxu0 %v215
    %249 = vmatprep.subr.bf16.mxu0 0
    %250 = vmatpush1.bf16.msra.mxu0 0
    %251 = vmatprep.subr.bf16.mxu0 0
    %252 = vmatpush1.bf16.msra.mxu0 0
    %253 = vmatprep.subr.bf16.mxu0 0
    %254 = vmatpush1.bf16.msra.mxu0 0
    %255 = vmatprep.subr.bf16.mxu0 0
    %256 = vmatpush1.bf16.msra.mxu0 0
    %257 = vmatprep.subr.bf16.mxu0 0
    %258 = vmatpush1.bf16.msra.mxu0 0
    %259 = vmatprep.subr.bf16.mxu0 0
    %260 = vmatpush1.bf16.msra.mxu0 0
    %261 = vmatprep.subr.bf16.mxu0 0
    %262 = vmatpush1.bf16.msra.mxu0 0
    %263 = vmatprep.subr.bf16.mxu0 0
    %264 = vmatpush1.bf16.msra.mxu0 0
    %265 = vmatprep.mubr.bf16.mxu0 0
    %266 = vmatmul.mubr.bf16.gmra.mrb[0].mxu0 %v124
    %v267 = vpop.f32.mrb[0].mxu0
    %v268 = vadd.f32 %v146, %v267
    %v269 = vpop.f32.mrb[0].mxu0
    %v270 = vadd.f32 %v150, %v269
    %v271 = vpop.f32.mrb[0].mxu0
    %v272 = vadd.f32 %v146, %v271
    %v273 = vpop.f32.mrb[0].mxu0
    %v274 = vadd.f32 %v150, %v273
    %275 = vdwg.mxu0
    %v276 = vmax.f32 %v268, 0.0
    %v277 = vmax.f32 %v270, 0.0
    %v278 = vmax.f32 %v272, 0.0
    %v279 = vmax.f32 %v274, 0.0
    %v280 = vpack.c.bf16 %v278, %v276
    %v281 = vpack.c.bf16 %v279, %v277
    %v282 = vld [vmem:[#allocation7] sm:$0xff]
    %v283 = vld [vmem:[#allocation7 + $0x8] sm:$0xff]
    %v284 = vld [vmem:[#allocation7 + $0x10] sm:$0xff]
    %v285 = vld [vmem:[#allocation7 + $0x18] sm:$0xff]
    %v286 = vld [vmem:[#allocation7 + $0x20] sm:$0xff]
    %v287 = vld [vmem:[#allocation7 + $0x28] sm:$0xff]
    %v288 = vld [vmem:[#allocation7 + $0x30] sm:$0xff]
    %v289 = vld [vmem:[#allocation7 + $0x38] sm:$0xff]
    %v290 = vld [vmem:[#allocation7 + $0x40] sm:$0xff]
    %v291 = vld [vmem:[#allocation7 + $0x48] sm:$0xff]
    %v292 = vld [vmem:[#allocation7 + $0x50] sm:$0xff]
    %v293 = vld [vmem:[#allocation7 + $0x58] sm:$0xff]
    %v294 = vld [vmem:[#allocation7 + $0x60] sm:$0xff]
    %v295 = vld [vmem:[#allocation7 + $0x68] sm:$0xff]
    %v296 = vld [vmem:[#allocation7 + $0x70] sm:$0xff]
    %v297 = vld [vmem:[#allocation7 + $0x78] sm:$0xff]
    %v298 = vld [vmem:[#allocation7 + $0x80] sm:$0xff]
    %v299 = vld [vmem:[#allocation7 + $0x88] sm:$0xff]
    %v300 = vld [vmem:[#allocation7 + $0x90] sm:$0xff]
    %v301 = vld [vmem:[#allocation7 + $0x98] sm:$0xff]
    %v302 = vld [vmem:[#allocation7 + $0xa0] sm:$0xff]
    %v303 = vld [vmem:[#allocation7 + $0xa8] sm:$0xff]
    %v304 = vld [vmem:[#allocation7 + $0xb0] sm:$0xff]
    %v305 = vld [vmem:[#allocation7 + $0xb8] sm:$0xff]
    %v306 = vld [vmem:[#allocation7 + $0xc0] sm:$0xff]
    %v307 = vld [vmem:[#allocation7 + $0xc8] sm:$0xff]
    %v308 = vld [vmem:[#allocation7 + $0xd0] sm:$0xff]
    %v309 = vld [vmem:[#allocation7 + $0xd8] sm:$0xff]
    %v310 = vld [vmem:[#allocation7 + $0xe0] sm:$0xff]
    %v311 = vld [vmem:[#allocation7 + $0xe8] sm:$0xff]
    %v312 = vld [vmem:[#allocation7 + $0xf0] sm:$0xff]
    %v313 = vld [vmem:[#allocation7 + $0xf8] sm:$0xff]
    %v314 = vld [vmem:[%s4] sm:$0x3]
    %v316 = vlaneseq
    %v317 = vshrl.u32 %v316, 7
    %v318 = vsub.s32 0, %v317
    %v319 = vrot.slane %v314, %v318
    %v320 = vlaneseq
    %v321 = vshrl.u32 %v320, 7
    %v322 = vsub.s32 1, %v321
    %v323 = vrot.slane %v314, %v322
    %v358 = vunpack.c.l.b16 %v282
    %v359 = vunpack.c.h.b16 %v282
    %v360 = vunpack.c.l.b16 %v283
    %v361 = vunpack.c.h.b16 %v283
    %v362 = vunpack.c.l.b16 %v284
    %v363 = vunpack.c.h.b16 %v284
    %v364 = vunpack.c.l.b16 %v285
    %v365 = vunpack.c.h.b16 %v285
    %v366 = vunpack.c.l.b16 %v286
    %v367 = vunpack.c.h.b16 %v286
    %v368 = vunpack.c.l.b16 %v287
    %v369 = vunpack.c.h.b16 %v287
    %v370 = vunpack.c.l.b16 %v288
    %v371 = vunpack.c.h.b16 %v288
    %v372 = vunpack.c.l.b16 %v289
    %v373 = vunpack.c.h.b16 %v289
    %v374 = vunpack.c.l.b16 %v290
    %v375 = vunpack.c.h.b16 %v290
    %v376 = vunpack.c.l.b16 %v291
    %v377 = vunpack.c.h.b16 %v291
    %v378 = vunpack.c.l.b16 %v292
    %v379 = vunpack.c.h.b16 %v292
    %v380 = vunpack.c.l.b16 %v293
    %v381 = vunpack.c.h.b16 %v293
    %v382 = vunpack.c.l.b16 %v294
    %v383 = vunpack.c.h.b16 %v294
    %v384 = vunpack.c.l.b16 %v295
    %v385 = vunpack.c.h.b16 %v295
    %v386 = vunpack.c.l.b16 %v296
    %v387 = vunpack.c.h.b16 %v296
    %v388 = vunpack.c.l.b16 %v297
    %v389 = vunpack.c.h.b16 %v297
    %v390 = vunpack.c.l.b16 %v298
    %v391 = vunpack.c.h.b16 %v298
    %v392 = vunpack.c.l.b16 %v299
    %v393 = vunpack.c.h.b16 %v299
    %v394 = vunpack.c.l.b16 %v300
    %v395 = vunpack.c.h.b16 %v300
    %v396 = vunpack.c.l.b16 %v301
    %v397 = vunpack.c.h.b16 %v301
    %v398 = vunpack.c.l.b16 %v302
    %v399 = vunpack.c.h.b16 %v302
    %v400 = vunpack.c.l.b16 %v303
    %v401 = vunpack.c.h.b16 %v303
    %v402 = vunpack.c.l.b16 %v304
    %v403 = vunpack.c.h.b16 %v304
    %v404 = vunpack.c.l.b16 %v305
    %v405 = vunpack.c.h.b16 %v305
    %v406 = vunpack.c.l.b16 %v306
    %v407 = vunpack.c.h.b16 %v306
    %v408 = vunpack.c.l.b16 %v307
    %v409 = vunpack.c.h.b16 %v307
    %v410 = vunpack.c.l.b16 %v308
    %v411 = vunpack.c.h.b16 %v308
    %v412 = vunpack.c.l.b16 %v309
    %v413 = vunpack.c.h.b16 %v309
    %v414 = vunpack.c.l.b16 %v310
    %v415 = vunpack.c.h.b16 %v310
    %v416 = vunpack.c.l.b16 %v311
    %v417 = vunpack.c.h.b16 %v311
    %v418 = vunpack.c.l.b16 %v312
    %v419 = vunpack.c.h.b16 %v312
    %v420 = vunpack.c.l.b16 %v313
    %v421 = vunpack.c.h.b16 %v313
    %v422 = vpack.c.b16 %v360, %v358
    %v423 = vpack.c.b16 %v361, %v359
    %v424 = vpack.c.b16 %v364, %v362
    %v425 = vpack.c.b16 %v365, %v363
    %v426 = vpack.c.b16 %v368, %v366
    %v427 = vpack.c.b16 %v369, %v367
    %v428 = vpack.c.b16 %v372, %v370
    %v429 = vpack.c.b16 %v373, %v371
    %v430 = vpack.c.b16 %v376, %v374
    %v431 = vpack.c.b16 %v377, %v375
    %v432 = vpack.c.b16 %v380, %v378
    %v433 = vpack.c.b16 %v381, %v379
    %v434 = vpack.c.b16 %v384, %v382
    %v435 = vpack.c.b16 %v385, %v383
    %v436 = vpack.c.b16 %v388, %v386
    %v437 = vpack.c.b16 %v389, %v387
    %v438 = vpack.c.b16 %v392, %v390
    %v439 = vpack.c.b16 %v393, %v391
    %v440 = vpack.c.b16 %v396, %v394
    %v441 = vpack.c.b16 %v397, %v395
    %v442 = vpack.c.b16 %v400, %v398
    %v443 = vpack.c.b16 %v401, %v399
    %v444 = vpack.c.b16 %v404, %v402
    %v445 = vpack.c.b16 %v405, %v403
    %v446 = vpack.c.b16 %v408, %v406
    %v447 = vpack.c.b16 %v409, %v407
    %v448 = vpack.c.b16 %v412, %v410
    %v449 = vpack.c.b16 %v413, %v411
    %v450 = vpack.c.b16 %v416, %v414
    %v451 = vpack.c.b16 %v417, %v415
    %v452 = vpack.c.b16 %v420, %v418
    %v453 = vpack.c.b16 %v421, %v419
    %486 = vmatprep.subr.bf16.mxu0 %v423
    %487 = vmatpush1.bf16.msra.mxu0 %v422
    %488 = vmatprep.subr.bf16.mxu0 %v425
    %489 = vmatpush1.bf16.msra.mxu0 %v424
    %490 = vmatprep.subr.bf16.mxu0 %v427
    %491 = vmatpush1.bf16.msra.mxu0 %v426
    %492 = vmatprep.subr.bf16.mxu0 %v429
    %493 = vmatpush1.bf16.msra.mxu0 %v428
    %494 = vmatprep.subr.bf16.mxu0 %v431
    %495 = vmatpush1.bf16.msra.mxu0 %v430
    %496 = vmatprep.subr.bf16.mxu0 %v433
    %497 = vmatpush1.bf16.msra.mxu0 %v432
    %498 = vmatprep.subr.bf16.mxu0 %v435
    %499 = vmatpush1.bf16.msra.mxu0 %v434
    %500 = vmatprep.subr.bf16.mxu0 %v437
    %501 = vmatpush1.bf16.msra.mxu0 %v436
    %502 = vmatprep.subr.bf16.mxu0 %v439
    %503 = vmatpush1.bf16.msra.mxu0 %v438
    %504 = vmatprep.subr.bf16.mxu0 %v441
    %505 = vmatpush1.bf16.msra.mxu0 %v440
    %506 = vmatprep.subr.bf16.mxu0 %v443
    %507 = vmatpush1.bf16.msra.mxu0 %v442
    %508 = vmatprep.subr.bf16.mxu0 %v445
    %509 = vmatpush1.bf16.msra.mxu0 %v444
    %510 = vmatprep.subr.bf16.mxu0 %v447
    %511 = vmatpush1.bf16.msra.mxu0 %v446
    %512 = vmatprep.subr.bf16.mxu0 %v449
    %513 = vmatpush1.bf16.msra.mxu0 %v448
    %514 = vmatprep.subr.bf16.mxu0 %v451
    %515 = vmatpush1.bf16.msra.mxu0 %v450
    %516 = vmatprep.subr.bf16.mxu0 %v453
    %517 = vmatpush1.bf16.msra.mxu0 %v452
    %518 = vmatprep.mubr.bf16.mxu0 %v281
    %519 = vmatmul.mubr.bf16.gmra.mrb[0].mxu0 %v280
    %v520 = vpop.f32.mrb[0].mxu0
    %v521 = vadd.f32 %v319, %v520
    %v522 = vpop.f32.mrb[0].mxu0
    %v523 = vadd.f32 %v323, %v522
    %v524 = vpop.f32.mrb[0].mxu0
    %v525 = vadd.f32 %v319, %v524
    %v526 = vpop.f32.mrb[0].mxu0
    %v527 = vadd.f32 %v323, %v526
    %528 = vdwg.mxu0
    %v529 = vmax.f32 %v521, 0.0
    %v530 = vmax.f32 %v523, 0.0
    %v531 = vmax.f32 %v525, 0.0
    %v532 = vmax.f32 %v527, 0.0
    %v533 = vpack.c.bf16 %v531, %v529
    %v534 = vpack.c.bf16 %v532, %v530
    %v535 = vld [vmem:[#allocation8] sm:$0xff]
    %v536 = vld [vmem:[#allocation8 + $0x8] sm:$0xff]
    %v537 = vld [vmem:[#allocation8 + $0x10] sm:$0xff]
    %v538 = vld [vmem:[#allocation8 + $0x18] sm:$0xff]
    %v539 = vld [vmem:[#allocation8 + $0x20] sm:$0xff]
    %v540 = vld [vmem:[#allocation8 + $0x28] sm:$0xff]
    %v541 = vld [vmem:[#allocation8 + $0x30] sm:$0xff]
    %v542 = vld [vmem:[#allocation8 + $0x38] sm:$0xff]
    %v543 = vld [vmem:[#allocation8 + $0x40] sm:$0xff]
    %v544 = vld [vmem:[#allocation8 + $0x48] sm:$0xff]
    %v545 = vld [vmem:[#allocation8 + $0x50] sm:$0xff]
    %v546 = vld [vmem:[#allocation8 + $0x58] sm:$0xff]
    %v547 = vld [vmem:[#allocation8 + $0x60] sm:$0xff]
    %v548 = vld [vmem:[#allocation8 + $0x68] sm:$0xff]
    %v549 = vld [vmem:[#allocation8 + $0x70] sm:$0xff]
    %v550 = vld [vmem:[#allocation8 + $0x78] sm:$0xff]
    %v551 = vld [vmem:[#allocation8 + $0x80] sm:$0xff]
    %v552 = vld [vmem:[#allocation8 + $0x88] sm:$0xff]
    %v553 = vld [vmem:[#allocation8 + $0x90] sm:$0xff]
    %v554 = vld [vmem:[#allocation8 + $0x98] sm:$0xff]
    %v555 = vld [vmem:[#allocation8 + $0xa0] sm:$0xff]
    %v556 = vld [vmem:[#allocation8 + $0xa8] sm:$0xff]
    %v557 = vld [vmem:[#allocation8 + $0xb0] sm:$0xff]
    %v558 = vld [vmem:[#allocation8 + $0xb8] sm:$0xff]
    %v559 = vld [vmem:[#allocation8 + $0xc0] sm:$0xff]
    %v560 = vld [vmem:[#allocation8 + $0xc8] sm:$0xff]
    %v561 = vld [vmem:[#allocation8 + $0xd0] sm:$0xff]
    %v562 = vld [vmem:[#allocation8 + $0xd8] sm:$0xff]
    %v563 = vld [vmem:[#allocation8 + $0xe0] sm:$0xff]
    %v564 = vld [vmem:[#allocation8 + $0xe8] sm:$0xff]
    %v565 = vld [vmem:[#allocation8 + $0xf0] sm:$0xff]
    %v566 = vld [vmem:[#allocation8 + $0xf8] sm:$0xff]
    %v567 = vld [vmem:[%s6] sm:$0x3]
    %v569 = vlaneseq
    %v570 = vshrl.u32 %v569, 7
    %v571 = vsub.s32 0, %v570
    %v572 = vrot.slane %v567, %v571
    %v573 = vlaneseq
    %v574 = vshrl.u32 %v573, 7
    %v575 = vsub.s32 1, %v574
    %v576 = vrot.slane %v567, %v575
    %v611 = vunpack.c.l.b16 %v535
    %v612 = vunpack.c.h.b16 %v535
    %v613 = vunpack.c.l.b16 %v536
    %v614 = vunpack.c.h.b16 %v536
    %v615 = vunpack.c.l.b16 %v537
    %v616 = vunpack.c.h.b16 %v537
    %v617 = vunpack.c.l.b16 %v538
    %v618 = vunpack.c.h.b16 %v538
    %v619 = vunpack.c.l.b16 %v539
    %v620 = vunpack.c.h.b16 %v539
    %v621 = vunpack.c.l.b16 %v540
    %v622 = vunpack.c.h.b16 %v540
    %v623 = vunpack.c.l.b16 %v541
    %v624 = vunpack.c.h.b16 %v541
    %v625 = vunpack.c.l.b16 %v542
    %v626 = vunpack.c.h.b16 %v542
    %v627 = vunpack.c.l.b16 %v543
    %v628 = vunpack.c.h.b16 %v543
    %v629 = vunpack.c.l.b16 %v544
    %v630 = vunpack.c.h.b16 %v544
    %v631 = vunpack.c.l.b16 %v545
    %v632 = vunpack.c.h.b16 %v545
    %v633 = vunpack.c.l.b16 %v546
    %v634 = vunpack.c.h.b16 %v546
    %v635 = vunpack.c.l.b16 %v547
    %v636 = vunpack.c.h.b16 %v547
    %v637 = vunpack.c.l.b16 %v548
    %v638 = vunpack.c.h.b16 %v548
    %v639 = vunpack.c.l.b16 %v549
    %v640 = vunpack.c.h.b16 %v549
    %v641 = vunpack.c.l.b16 %v550
    %v642 = vunpack.c.h.b16 %v550
    %v643 = vunpack.c.l.b16 %v551
    %v644 = vunpack.c.h.b16 %v551
    %v645 = vunpack.c.l.b16 %v552
    %v646 = vunpack.c.h.b16 %v552
    %v647 = vunpack.c.l.b16 %v553
    %v648 = vunpack.c.h.b16 %v553
    %v649 = vunpack.c.l.b16 %v554
    %v650 = vunpack.c.h.b16 %v554
    %v651 = vunpack.c.l.b16 %v555
    %v652 = vunpack.c.h.b16 %v555
    %v653 = vunpack.c.l.b16 %v556
    %v654 = vunpack.c.h.b16 %v556
    %v655 = vunpack.c.l.b16 %v557
    %v656 = vunpack.c.h.b16 %v557
    %v657 = vunpack.c.l.b16 %v558
    %v658 = vunpack.c.h.b16 %v558
    %v659 = vunpack.c.l.b16 %v559
    %v660 = vunpack.c.h.b16 %v559
    %v661 = vunpack.c.l.b16 %v560
    %v662 = vunpack.c.h.b16 %v560
    %v663 = vunpack.c.l.b16 %v561
    %v664 = vunpack.c.h.b16 %v561
    %v665 = vunpack.c.l.b16 %v562
    %v666 = vunpack.c.h.b16 %v562
    %v667 = vunpack.c.l.b16 %v563
    %v668 = vunpack.c.h.b16 %v563
    %v669 = vunpack.c.l.b16 %v564
    %v670 = vunpack.c.h.b16 %v564
    %v671 = vunpack.c.l.b16 %v565
    %v672 = vunpack.c.h.b16 %v565
    %v673 = vunpack.c.l.b16 %v566
    %v674 = vunpack.c.h.b16 %v566
    %v675 = vpack.c.b16 %v613, %v611
    %v676 = vpack.c.b16 %v614, %v612
    %v677 = vpack.c.b16 %v617, %v615
    %v678 = vpack.c.b16 %v618, %v616
    %v679 = vpack.c.b16 %v621, %v619
    %v680 = vpack.c.b16 %v622, %v620
    %v681 = vpack.c.b16 %v625, %v623
    %v682 = vpack.c.b16 %v626, %v624
    %v683 = vpack.c.b16 %v629, %v627
    %v684 = vpack.c.b16 %v630, %v628
    %v685 = vpack.c.b16 %v633, %v631
    %v686 = vpack.c.b16 %v634, %v632
    %v687 = vpack.c.b16 %v637, %v635
    %v688 = vpack.c.b16 %v638, %v636
    %v689 = vpack.c.b16 %v641, %v639
    %v690 = vpack.c.b16 %v642, %v640
    %v691 = vpack.c.b16 %v645, %v643
    %v692 = vpack.c.b16 %v646, %v644
    %v693 = vpack.c.b16 %v649, %v647
    %v694 = vpack.c.b16 %v650, %v648
    %v695 = vpack.c.b16 %v653, %v651
    %v696 = vpack.c.b16 %v654, %v652
    %v697 = vpack.c.b16 %v657, %v655
    %v698 = vpack.c.b16 %v658, %v656
    %v699 = vpack.c.b16 %v661, %v659
    %v700 = vpack.c.b16 %v662, %v660
    %v701 = vpack.c.b16 %v665, %v663
    %v702 = vpack.c.b16 %v666, %v664
    %v703 = vpack.c.b16 %v669, %v667
    %v704 = vpack.c.b16 %v670, %v668
    %v705 = vpack.c.b16 %v673, %v671
    %v706 = vpack.c.b16 %v674, %v672
    %739 = vmatprep.subr.bf16.mxu0 %v676
    %740 = vmatpush1.bf16.msra.mxu0 %v675
    %741 = vmatprep.subr.bf16.mxu0 %v678
    %742 = vmatpush1.bf16.msra.mxu0 %v677
    %743 = vmatprep.subr.bf16.mxu0 %v680
    %744 = vmatpush1.bf16.msra.mxu0 %v679
    %745 = vmatprep.subr.bf16.mxu0 %v682
    %746 = vmatpush1.bf16.msra.mxu0 %v681
    %747 = vmatprep.subr.bf16.mxu0 %v684
    %748 = vmatpush1.bf16.msra.mxu0 %v683
    %749 = vmatprep.subr.bf16.mxu0 %v686
    %750 = vmatpush1.bf16.msra.mxu0 %v685
    %751 = vmatprep.subr.bf16.mxu0 %v688
    %752 = vmatpush1.bf16.msra.mxu0 %v687
    %753 = vmatprep.subr.bf16.mxu0 %v690
    %754 = vmatpush1.bf16.msra.mxu0 %v689
    %755 = vmatprep.subr.bf16.mxu0 %v692
    %756 = vmatpush1.bf16.msra.mxu0 %v691
    %757 = vmatprep.subr.bf16.mxu0 %v694
    %758 = vmatpush1.bf16.msra.mxu0 %v693
    %759 = vmatprep.subr.bf16.mxu0 %v696
    %760 = vmatpush1.bf16.msra.mxu0 %v695
    %761 = vmatprep.subr.bf16.mxu0 %v698
    %762 = vmatpush1.bf16.msra.mxu0 %v697
    %763 = vmatprep.subr.bf16.mxu0 %v700
    %764 = vmatpush1.bf16.msra.mxu0 %v699
    %765 = vmatprep.subr.bf16.mxu0 %v702
    %766 = vmatpush1.bf16.msra.mxu0 %v701
    %767 = vmatprep.subr.bf16.mxu0 %v704
    %768 = vmatpush1.bf16.msra.mxu0 %v703
    %769 = vmatprep.subr.bf16.mxu0 %v706
    %770 = vmatpush1.bf16.msra.mxu0 %v705
    %771 = vmatprep.mubr.bf16.mxu0 %v534
    %772 = vmatmul.mubr.bf16.gmra.mrb[0].mxu0 %v533
    %v773 = vpop.f32.mrb[0].mxu0
    %v774 = vadd.f32 %v572, %v773
    %v775 = vpop.f32.mrb[0].mxu0
    %v776 = vadd.f32 %v576, %v775
    %v777 = vpop.f32.mrb[0].mxu0
    %v778 = vadd.f32 %v572, %v777
    %v779 = vpop.f32.mrb[0].mxu0
    %v780 = vadd.f32 %v576, %v779
    %781 = vdwg.mxu0
    %v782 = vmax.f32 %v774, 0.0
    %v783 = vmax.f32 %v776, 0.0
    %v784 = vmax.f32 %v778, 0.0
    %v785 = vmax.f32 %v780, 0.0
    %v786 = vpack.c.bf16 %v784, %v782
    %v787 = vpack.c.bf16 %v785, %v783
    %v788 = vld [vmem:[#allocation10] sm:$0xff]
    %v789 = vld [vmem:[#allocation10 + $0x8] sm:$0xff]
    %v790 = vld [vmem:[#allocation10 + $0x10] sm:$0xff]
    %v791 = vld [vmem:[#allocation10 + $0x18] sm:$0xff]
    %v792 = vld [vmem:[#allocation10 + $0x20] sm:$0xff]
    %v793 = vld [vmem:[#allocation10 + $0x28] sm:$0xff]
    %v794 = vld [vmem:[#allocation10 + $0x30] sm:$0xff]
    %v795 = vld [vmem:[#allocation10 + $0x38] sm:$0xff]
    %v796 = vld [vmem:[#allocation10 + $0x40] sm:$0xff]
    %v797 = vld [vmem:[#allocation10 + $0x48] sm:$0xff]
    %v798 = vld [vmem:[#allocation10 + $0x50] sm:$0xff]
    %v799 = vld [vmem:[#allocation10 + $0x58] sm:$0xff]
    %v800 = vld [vmem:[#allocation10 + $0x60] sm:$0xff]
    %v801 = vld [vmem:[#allocation10 + $0x68] sm:$0xff]
    %v802 = vld [vmem:[#allocation10 + $0x70] sm:$0xff]
    %v803 = vld [vmem:[#allocation10 + $0x78] sm:$0xff]
    %v804 = vld [vmem:[#allocation10 + $0x80] sm:$0xff]
    %v805 = vld [vmem:[#allocation10 + $0x88] sm:$0xff]
    %v806 = vld [vmem:[#allocation10 + $0x90] sm:$0xff]
    %v807 = vld [vmem:[#allocation10 + $0x98] sm:$0xff]
    %v808 = vld [vmem:[#allocation10 + $0xa0] sm:$0xff]
    %v809 = vld [vmem:[#allocation10 + $0xa8] sm:$0xff]
    %v810 = vld [vmem:[#allocation10 + $0xb0] sm:$0xff]
    %v811 = vld [vmem:[#allocation10 + $0xb8] sm:$0xff]
    %v812 = vld [vmem:[#allocation10 + $0xc0] sm:$0xff]
    %v813 = vld [vmem:[#allocation10 + $0xc8] sm:$0xff]
    %v814 = vld [vmem:[#allocation10 + $0xd0] sm:$0xff]
    %v815 = vld [vmem:[#allocation10 + $0xd8] sm:$0xff]
    %v816 = vld [vmem:[#allocation10 + $0xe0] sm:$0xff]
    %v817 = vld [vmem:[#allocation10 + $0xe8] sm:$0xff]
    %v818 = vld [vmem:[#allocation10 + $0xf0] sm:$0xff]
    %v819 = vld [vmem:[#allocation10 + $0xf8] sm:$0xff]
    %v820 = vld [vmem:[%s8] sm:$0x3]
    %v822 = vlaneseq
    %v823 = vshrl.u32 %v822, 7
    %v824 = vsub.s32 0, %v823
    %v825 = vrot.slane %v820, %v824
    %v826 = vlaneseq
    %v827 = vshrl.u32 %v826, 7
    %v828 = vsub.s32 1, %v827
    %v829 = vrot.slane %v820, %v828
    %v864 = vunpack.c.l.b16 %v788
    %v865 = vunpack.c.h.b16 %v788
    %v866 = vunpack.c.l.b16 %v789
    %v867 = vunpack.c.h.b16 %v789
    %v868 = vunpack.c.l.b16 %v790
    %v869 = vunpack.c.h.b16 %v790
    %v870 = vunpack.c.l.b16 %v791
    %v871 = vunpack.c.h.b16 %v791
    %v872 = vunpack.c.l.b16 %v792
    %v873 = vunpack.c.h.b16 %v792
    %v874 = vunpack.c.l.b16 %v793
    %v875 = vunpack.c.h.b16 %v793
    %v876 = vunpack.c.l.b16 %v794
    %v877 = vunpack.c.h.b16 %v794
    %v878 = vunpack.c.l.b16 %v795
    %v879 = vunpack.c.h.b16 %v795
    %v880 = vunpack.c.l.b16 %v796
    %v881 = vunpack.c.h.b16 %v796
    %v882 = vunpack.c.l.b16 %v797
    %v883 = vunpack.c.h.b16 %v797
    %v884 = vunpack.c.l.b16 %v798
    %v885 = vunpack.c.h.b16 %v798
    %v886 = vunpack.c.l.b16 %v799
    %v887 = vunpack.c.h.b16 %v799
    %v888 = vunpack.c.l.b16 %v800
    %v889 = vunpack.c.h.b16 %v800
    %v890 = vunpack.c.l.b16 %v801
    %v891 = vunpack.c.h.b16 %v801
    %v892 = vunpack.c.l.b16 %v802
    %v893 = vunpack.c.h.b16 %v802
    %v894 = vunpack.c.l.b16 %v803
    %v895 = vunpack.c.h.b16 %v803
    %v896 = vunpack.c.l.b16 %v804
    %v897 = vunpack.c.h.b16 %v804
    %v898 = vunpack.c.l.b16 %v805
    %v899 = vunpack.c.h.b16 %v805
    %v900 = vunpack.c.l.b16 %v806
    %v901 = vunpack.c.h.b16 %v806
    %v902 = vunpack.c.l.b16 %v807
    %v903 = vunpack.c.h.b16 %v807
    %v904 = vunpack.c.l.b16 %v808
    %v905 = vunpack.c.h.b16 %v808
    %v906 = vunpack.c.l.b16 %v809
    %v907 = vunpack.c.h.b16 %v809
    %v908 = vunpack.c.l.b16 %v810
    %v909 = vunpack.c.h.b16 %v810
    %v910 = vunpack.c.l.b16 %v811
    %v911 = vunpack.c.h.b16 %v811
    %v912 = vunpack.c.l.b16 %v812
    %v913 = vunpack.c.h.b16 %v812
    %v914 = vunpack.c.l.b16 %v813
    %v915 = vunpack.c.h.b16 %v813
    %v916 = vunpack.c.l.b16 %v814
    %v917 = vunpack.c.h.b16 %v814
    %v918 = vunpack.c.l.b16 %v815
    %v919 = vunpack.c.h.b16 %v815
    %v920 = vunpack.c.l.b16 %v816
    %v921 = vunpack.c.h.b16 %v816
    %v922 = vunpack.c.l.b16 %v817
    %v923 = vunpack.c.h.b16 %v817
    %v924 = vunpack.c.l.b16 %v818
    %v925 = vunpack.c.h.b16 %v818
    %v926 = vunpack.c.l.b16 %v819
    %v927 = vunpack.c.h.b16 %v819
    %v928 = vpack.c.b16 %v866, %v864
    %v929 = vpack.c.b16 %v867, %v865
    %v930 = vpack.c.b16 %v870, %v868
    %v931 = vpack.c.b16 %v871, %v869
    %v932 = vpack.c.b16 %v874, %v872
    %v933 = vpack.c.b16 %v875, %v873
    %v934 = vpack.c.b16 %v878, %v876
    %v935 = vpack.c.b16 %v879, %v877
    %v936 = vpack.c.b16 %v882, %v880
    %v937 = vpack.c.b16 %v883, %v881
    %v938 = vpack.c.b16 %v886, %v884
    %v939 = vpack.c.b16 %v887, %v885
    %v940 = vpack.c.b16 %v890, %v888
    %v941 = vpack.c.b16 %v891, %v889
    %v942 = vpack.c.b16 %v894, %v892
    %v943 = vpack.c.b16 %v895, %v893
    %v944 = vpack.c.b16 %v898, %v896
    %v945 = vpack.c.b16 %v899, %v897
    %v946 = vpack.c.b16 %v902, %v900
    %v947 = vpack.c.b16 %v903, %v901
    %v948 = vpack.c.b16 %v906, %v904
    %v949 = vpack.c.b16 %v907, %v905
    %v950 = vpack.c.b16 %v910, %v908
    %v951 = vpack.c.b16 %v911, %v909
    %v952 = vpack.c.b16 %v914, %v912
    %v953 = vpack.c.b16 %v915, %v913
    %v954 = vpack.c.b16 %v918, %v916
    %v955 = vpack.c.b16 %v919, %v917
    %v956 = vpack.c.b16 %v922, %v920
    %v957 = vpack.c.b16 %v923, %v921
    %v958 = vpack.c.b16 %v926, %v924
    %v959 = vpack.c.b16 %v927, %v925
    %992 = vmatprep.subr.bf16.mxu0 %v929
    %993 = vmatpush1.bf16.msra.mxu0 %v928
    %994 = vmatprep.subr.bf16.mxu0 %v931
    %995 = vmatpush1.bf16.msra.mxu0 %v930
    %996 = vmatprep.subr.bf16.mxu0 %v933
    %997 = vmatpush1.bf16.msra.mxu0 %v932
    %998 = vmatprep.subr.bf16.mxu0 %v935
    %999 = vmatpush1.bf16.msra.mxu0 %v934
    %1000 = vmatprep.subr.bf16.mxu0 %v937
    %1001 = vmatpush1.bf16.msra.mxu0 %v936
    %1002 = vmatprep.subr.bf16.mxu0 %v939
    %1003 = vmatpush1.bf16.msra.mxu0 %v938
    %1004 = vmatprep.subr.bf16.mxu0 %v941
    %1005 = vmatpush1.bf16.msra.mxu0 %v940
    %1006 = vmatprep.subr.bf16.mxu0 %v943
    %1007 = vmatpush1.bf16.msra.mxu0 %v942
    %1008 = vmatprep.subr.bf16.mxu0 %v945
    %1009 = vmatpush1.bf16.msra.mxu0 %v944
    %1010 = vmatprep.subr.bf16.mxu0 %v947
    %1011 = vmatpush1.bf16.msra.mxu0 %v946
    %1012 = vmatprep.subr.bf16.mxu0 %v949
    %1013 = vmatpush1.bf16.msra.mxu0 %v948
    %1014 = vmatprep.subr.bf16.mxu0 %v951
    %1015 = vmatpush1.bf16.msra.mxu0 %v950
    %1016 = vmatprep.subr.bf16.mxu0 %v953
    %1017 = vmatpush1.bf16.msra.mxu0 %v952
    %1018 = vmatprep.subr.bf16.mxu0 %v955
    %1019 = vmatpush1.bf16.msra.mxu0 %v954
    %1020 = vmatprep.subr.bf16.mxu0 %v957
    %1021 = vmatpush1.bf16.msra.mxu0 %v956
    %1022 = vmatprep.subr.bf16.mxu0 %v959
    %1023 = vmatpush1.bf16.msra.mxu0 %v958
    %1024 = vmatprep.mubr.bf16.mxu0 %v787
    %1025 = vmatmul.mubr.bf16.gmra.mrb[0].mxu0 %v786
    %v1026 = vpop.f32.mrb[0].mxu0
    %v1027 = vadd.f32 %v825, %v1026
    %v1028 = vpop.f32.mrb[0].mxu0
    %v1029 = vadd.f32 %v829, %v1028
    %v1030 = vpop.f32.mrb[0].mxu0
    %v1031 = vadd.f32 %v825, %v1030
    %v1032 = vpop.f32.mrb[0].mxu0
    %v1033 = vadd.f32 %v829, %v1032
    %1034 = vdwg.mxu0
    %v1035 = vmax.f32 %v1027, 0.0
    %v1036 = vmax.f32 %v1029, 0.0
    %v1037 = vmax.f32 %v1031, 0.0
    %v1038 = vmax.f32 %v1033, 0.0
    %v1039 = vpack.c.bf16 %v1037, %v1035
    %v1040 = vpack.c.bf16 %v1038, %v1036
    %v1041 = vld [vmem:[#allocation11] sm:$0xf]
    %v1042 = vld [vmem:[#allocation11 + $0x4] sm:$0xf]
    %v1043 = vld [vmem:[#allocation11 + $0x8] sm:$0xf]
    %v1044 = vld [vmem:[#allocation11 + $0xc] sm:$0xf]
    %v1045 = vld [vmem:[#allocation11 + $0x10] sm:$0xf]
    %v1046 = vld [vmem:[#allocation11 + $0x14] sm:$0xf]
    %v1047 = vld [vmem:[#allocation11 + $0x18] sm:$0xf]
    %v1048 = vld [vmem:[#allocation11 + $0x1c] sm:$0xf]
    %v1049 = vld [vmem:[#allocation11 + $0x20] sm:$0xf]
    %v1050 = vld [vmem:[#allocation11 + $0x24] sm:$0xf]
    %v1051 = vld [vmem:[#allocation11 + $0x28] sm:$0xf]
    %v1052 = vld [vmem:[#allocation11 + $0x2c] sm:$0xf]
    %v1053 = vld [vmem:[#allocation11 + $0x30] sm:$0xf]
    %v1054 = vld [vmem:[#allocation11 + $0x34] sm:$0xf]
    %v1055 = vld [vmem:[#allocation11 + $0x38] sm:$0xf]
    %v1056 = vld [vmem:[#allocation11 + $0x3c] sm:$0xf]
    %v1057 = vld [vmem:[#allocation11 + $0x40] sm:$0xf]
    %v1058 = vld [vmem:[#allocation11 + $0x44] sm:$0xf]
    %v1059 = vld [vmem:[#allocation11 + $0x48] sm:$0xf]
    %v1060 = vld [vmem:[#allocation11 + $0x4c] sm:$0xf]
    %v1061 = vld [vmem:[#allocation11 + $0x50] sm:$0xf]
    %v1062 = vld [vmem:[#allocation11 + $0x54] sm:$0xf]
    %v1063 = vld [vmem:[#allocation11 + $0x58] sm:$0xf]
    %v1064 = vld [vmem:[#allocation11 + $0x5c] sm:$0xf]
    %v1065 = vld [vmem:[#allocation11 + $0x60] sm:$0xf]
    %v1066 = vld [vmem:[#allocation11 + $0x64] sm:$0xf]
    %v1067 = vld [vmem:[#allocation11 + $0x68] sm:$0xf]
    %v1068 = vld [vmem:[#allocation11 + $0x6c] sm:$0xf]
    %v1069 = vld [vmem:[#allocation11 + $0x70] sm:$0xf]
    %v1070 = vld [vmem:[#allocation11 + $0x74] sm:$0xf]
    %v1071 = vld [vmem:[#allocation11 + $0x78] sm:$0xf]
    %v1072 = vld [vmem:[#allocation11 + $0x7c] sm:$0xf]
    %v1073 = vld [vmem:[%s10] sm:$0x1]
    %v1075 = vlaneseq
    %v1076 = vshrl.u32 %v1075, 7
    %v1077 = vsub.s32 0, %v1076
    %v1078 = vrot.slane %v1073, %v1077
    %v1112 = vunpack.c.l.b16 %v1041
    %v1113 = vunpack.c.l.b16 %v1042
    %v1114 = vunpack.c.l.b16 %v1043
    %v1115 = vunpack.c.l.b16 %v1044
    %v1116 = vunpack.c.l.b16 %v1045
    %v1117 = vunpack.c.l.b16 %v1046
    %v1118 = vunpack.c.l.b16 %v1047
    %v1119 = vunpack.c.l.b16 %v1048
    %v1120 = vunpack.c.l.b16 %v1049
    %v1121 = vunpack.c.l.b16 %v1050
    %v1122 = vunpack.c.l.b16 %v1051
    %v1123 = vunpack.c.l.b16 %v1052
    %v1124 = vunpack.c.l.b16 %v1053
    %v1125 = vunpack.c.l.b16 %v1054
    %v1126 = vunpack.c.l.b16 %v1055
    %v1127 = vunpack.c.l.b16 %v1056
    %v1128 = vunpack.c.l.b16 %v1057
    %v1129 = vunpack.c.l.b16 %v1058
    %v1130 = vunpack.c.l.b16 %v1059
    %v1131 = vunpack.c.l.b16 %v1060
    %v1132 = vunpack.c.l.b16 %v1061
    %v1133 = vunpack.c.l.b16 %v1062
    %v1134 = vunpack.c.l.b16 %v1063
    %v1135 = vunpack.c.l.b16 %v1064
    %v1136 = vunpack.c.l.b16 %v1065
    %v1137 = vunpack.c.l.b16 %v1066
    %v1138 = vunpack.c.l.b16 %v1067
    %v1139 = vunpack.c.l.b16 %v1068
    %v1140 = vunpack.c.l.b16 %v1069
    %v1141 = vunpack.c.l.b16 %v1070
    %v1142 = vunpack.c.l.b16 %v1071
    %v1143 = vunpack.c.l.b16 %v1072
    %v1144 = vpack.c.b16 %v1113, %v1112
    %v1145 = vpack.c.b16 %v1115, %v1114
    %v1146 = vpack.c.b16 %v1117, %v1116
    %v1147 = vpack.c.b16 %v1119, %v1118
    %v1148 = vpack.c.b16 %v1121, %v1120
    %v1149 = vpack.c.b16 %v1123, %v1122
    %v1150 = vpack.c.b16 %v1125, %v1124
    %v1151 = vpack.c.b16 %v1127, %v1126
    %v1152 = vpack.c.b16 %v1129, %v1128
    %v1153 = vpack.c.b16 %v1131, %v1130
    %v1154 = vpack.c.b16 %v1133, %v1132
    %v1155 = vpack.c.b16 %v1135, %v1134
    %v1156 = vpack.c.b16 %v1137, %v1136
    %v1157 = vpack.c.b16 %v1139, %v1138
    %v1158 = vpack.c.b16 %v1141, %v1140
    %v1159 = vpack.c.b16 %v1143, %v1142
    %1176 = vmatprep.subr.bf16.mxu0 0
    %1177 = vmatpush1.bf16.msra.mxu0 %v1144
    %1178 = vmatprep.subr.bf16.mxu0 0
    %1179 = vmatpush1.bf16.msra.mxu0 %v1145
    %1180 = vmatprep.subr.bf16.mxu0 0
    %1181 = vmatpush1.bf16.msra.mxu0 %v1146
    %1182 = vmatprep.subr.bf16.mxu0 0
    %1183 = vmatpush1.bf16.msra.mxu0 %v1147
    %1184 = vmatprep.subr.bf16.mxu0 0
    %1185 = vmatpush1.bf16.msra.mxu0 %v1148
    %1186 = vmatprep.subr.bf16.mxu0 0
    %1187 = vmatpush1.bf16.msra.mxu0 %v1149
    %1188 = vmatprep.subr.bf16.mxu0 0
    %1189 = vmatpush1.bf16.msra.mxu0 %v1150
    %1190 = vmatprep.subr.bf16.mxu0 0
    %1191 = vmatpush1.bf16.msra.mxu0 %v1151
    %1192 = vmatprep.subr.bf16.mxu0 0
    %1193 = vmatpush1.bf16.msra.mxu0 %v1152
    %1194 = vmatprep.subr.bf16.mxu0 0
    %1195 = vmatpush1.bf16.msra.mxu0 %v1153
    %1196 = vmatprep.subr.bf16.mxu0 0
    %1197 = vmatpush1.bf16.msra.mxu0 %v1154
    %1198 = vmatprep.subr.bf16.mxu0 0
    %1199 = vmatpush1.bf16.msra.mxu0 %v1155
    %1200 = vmatprep.subr.bf16.mxu0 0
    %1201 = vmatpush1.bf16.msra.mxu0 %v1156
    %1202 = vmatprep.subr.bf16.mxu0 0
    %1203 = vmatpush1.bf16.msra.mxu0 %v1157
    %1204 = vmatprep.subr.bf16.mxu0 0
    %1205 = vmatpush1.bf16.msra.mxu0 %v1158
    %1206 = vmatprep.subr.bf16.mxu0 0
    %1207 = vmatpush1.bf16.msra.mxu0 %v1159
    %1208 = vmatprep.mubr.bf16.mxu0 %v1040
    %1209 = vmatmul.mubr.bf16.gmra.mrb[0].mxu0 %v1039
    %v1210 = vpop.f32.mrb[0].mxu0
    %v1211 = vadd.f32 %v1078, %v1210
    %v1212 = vpop.f32.mrb[0].mxu0
    %v1213 = vpop.f32.mrb[0].mxu0
    %v1214 = vadd.f32 %v1078, %v1213
    %v1215 = vpop.f32.mrb[0].mxu0
    %1216 = vdwg.mxu0
    %v1217 = vmax.f32 %v1211, 0.0
    %v1218 = vmax.f32 %v1214, 0.0
    %1219 = vst [vmem:[#allocation13] sm:$0xff] %v1217
    %1220 = vst [vmem:[#allocation13 + $0x8] sm:$0xff] %v1218
    // Predicated region
    $region70: #{tpu_custom_call.1} parent=1 // pred_check
      _
    $region71: #{tpu_custom_call.1} parent=1 // pred_check_branch
      %1222 = sbr.rel (0) target = $region73
    $region72: #{tpu_custom_call.1} parent=1 // pred_region
      %s1224 = ssub.s32 256, 256
      %1225 = vsyncadd [#allocation4], %s1224
      %s1226 = sshll.u32 [#allocation13], 4
      %s1227 = int_to_ptr.vmem [resolvable:$true] %s1226
      %1232 = dma.vmem_to_hbm [thread:$0]  %s1227, 256, %s11, [#allocation4], 128, 128, 8
    $region73: #{tpu_custom_call.1} parent=1 // pred_fallthru
      _
    // Predicated region
    $region74: #{tpu_custom_call.1} parent=1 // pred_check
      _
    $region75: #{tpu_custom_call.1} parent=1 // pred_check_branch
      %1234 = sbr.rel (0) target = $region77
    $region76: #{tpu_custom_call.1} parent=1 // pred_region
      %1235 = dma.done [#allocation4], 256
    $region77: #{tpu_custom_call.1} parent=1 // pred_fallthru
      _
    %1236 = vsyncpa [#allocation3], 1
    %1237 = vsyncpa [#allocation6], 1
    %1238 = vsyncpa [#allocation9], 1
    %1239 = vsyncpa [#allocation12], 1
    %1240 = vsyncpa [#allocation4], 1

</llo_original>
